<compile_context>
chip_gen: v5e
topology: v5e:2x2
jax: 0.10.0
libtpu: 0.0.40
codegen_flags: <defaults>
</compile_context>

<pallas_src>
import jax
import jax.numpy as jnp
from jax.experimental import pallas as pl
from jax.experimental.pallas import tpu as pltpu


def _round_up(n: int, m: int) -> int:
    return ((n + m - 1) // m) * m


def projector_kernel(x_ref, w1_ref, b1_ref, w2_ref, b2_ref, o_ref):
    # In-kernel cast of the streamed f32 tile to the MXU compute dtype (the
    # VPU cast hides under the MXU/DMA; avoids a wrapper-side HBM round trip).
    x = x_ref[...].astype(w1_ref.dtype)
    # Linear 1 (bf16 operands, f32 accumulation on the MXU)
    h = jnp.dot(x, w1_ref[...], preferred_element_type=jnp.float32)
    # Fused bias + ReLU + recast to compute dtype for matmul 2.
    h = jnp.maximum(h + b1_ref[...], 0.0).astype(w2_ref.dtype)
    # Linear 2, f32 accumulation, bias in f32, cast to output dtype.
    o = jnp.dot(h, w2_ref[...], preferred_element_type=jnp.float32)
    o_ref[...] = (o + b2_ref[...]).astype(o_ref.dtype)


def prepare_params(w1, b1, w2, b2, compute_dtype=jnp.bfloat16):
    """One-time parameter prep: transpose weights to (in, out) and cast to the
    MXU compute dtype. Do this at setup time, not per forward call."""
    w1_t = jnp.transpose(w1).astype(compute_dtype)          # (D_in, H)
    w2_t = jnp.transpose(w2).astype(compute_dtype)          # (H, D_out)
    b1_r = b1.reshape(1, -1).astype(jnp.float32)             # (1, H)
    b2_r = b2.reshape(1, -1).astype(jnp.float32)             # (1, D_out)
    return (w1_t, b1_r, w2_t, b2_r)


def _vmem_cap_bytes() -> int:
    """Per-chip VMEM ceiling with headroom for Mosaic scratch / DMA buffers."""
    try:
        phys = int(pltpu.get_tpu_info().vmem_capacity_bytes)
    except Exception:
        phys = 64 * 2 ** 20  # conservative (v7x per-TC)
    cap = max(phys - 16 * 2 ** 20, 32 * 2 ** 20)
    return int(min(cap, 100 * 2 ** 20))


def projector_forward(x, params, *, tm=512):
    """x: (M, D_in) float array; params from prepare_params()."""
    w1_t, b1_r, w2_t, b2_r = params
    M, D_in = x.shape
    H = w1_t.shape[1]
    D_out = w2_t.shape[1]
    out_dtype = x.dtype

    # Large batch tile (mem/overhead-bound kernel); multiple of 16 for packing.
    tm_eff = min(tm, _round_up(M, 16))
    # Keep >= 2 grid steps when the batch is big enough so "parallel" can
    # shard the batch across v7x's two TensorCores (one extra ~0.35us step on
    # single-TC v5e/v6e is negligible).
    if M >= 256 and pl.cdiv(M, tm_eff) < 2:
        tm_eff = _round_up(pl.cdiv(M, 2), 16)

    grid = (pl.cdiv(M, tm_eff),)

    # Explicit VMEM budget derived from the actual footprint, chip-capped.
    xb = jnp.dtype(x.dtype).itemsize
    cb = jnp.dtype(w1_t.dtype).itemsize
    ob = jnp.dtype(out_dtype).itemsize
    est = (2 * tm_eff * D_in * xb             # x tiles (double buffered)
           + 2 * tm_eff * D_out * ob          # out tiles
           + D_in * H * cb                    # W1^T (single-buffered resident)
           + H * D_out * cb                   # W2^T
           + 2 * (H + D_out) * 4              # biases
           + 3 * tm_eff * max(H, D_out) * 4)  # f32 intermediates
    vmem_limit = int(min(max(2 * est, 32 * 2 ** 20), _vmem_cap_bytes()))

    def build(use_buffered):
        def resident(shape):
            idx = lambda i: (0,) * len(shape)
            if use_buffered:
                return pl.BlockSpec(shape, idx, pipeline_mode=pl.Buffered(1))
            return pl.BlockSpec(shape, idx)

        return pl.pallas_call(
            projector_kernel,
            out_shape=jax.ShapeDtypeStruct((M, D_out), out_dtype),
            grid=grid,
            in_specs=[
                pl.BlockSpec((tm_eff, D_in), lambda i: (i, 0)),   # x tile
                resident((D_in, H)),                               # W1^T
                resident((1, H)),                                  # b1
                resident((H, D_out)),                              # W2^T
                resident((1, D_out)),                              # b2
            ],
            out_specs=pl.BlockSpec((tm_eff, D_out), lambda i: (i, 0)),
            compiler_params=pltpu.CompilerParams(
                dimension_semantics=("parallel",),
                vmem_limit_bytes=vmem_limit),
        )

    use_buffered = hasattr(pl, "Buffered")
    try:
        return build(use_buffered)(x, w1_t, b1_r, w2_t, b2_r)
    except Exception:
        if not use_buffered:
            raise
        # Fallback: identical kernel without single-buffered resident specs.
        return build(False)(x, w1_t, b1_r, w2_t, b2_r)


def reference_forward(x, w1, b1, w2, b2, compute_dtype=None):
    """Pure-JAX reference. If compute_dtype is given, mirrors the kernel's
    operand rounding (bf16 operands, f32 accumulation)."""
    if compute_dtype is not None:
        xc = x.astype(compute_dtype).astype(jnp.float32)
        w1c = w1.astype(compute_dtype).astype(jnp.float32)
        w2c = w2.astype(compute_dtype).astype(jnp.float32)
    else:
        xc, w1c, w2c = x, w1, w2
    h = jnp.maximum(xc @ w1c.T + b1, 0.0)
    if compute_dtype is not None:
        h = h.astype(compute_dtype).astype(jnp.float32)
    return (h @ w2c.T + b2).astype(x.dtype)


if __name__ == "__main__":
    # Projector(expansion=0): Linear(128, 128) -> ReLU -> Linear(128, 128)
    D = 128
    M = 256   # splits into 2 grid steps -> both v7x TensorCores get work

    key = jax.random.PRNGKey(0)
    kx, k1, k2, k3, k4 = jax.random.split(key, 5)

    # Mimic nn.Linear uniform(-1/sqrt(in), 1/sqrt(in)) init
    bound = 1.0 / jnp.sqrt(float(D))
    x = jax.random.normal(kx, (M, D), dtype=jnp.float32)
    w1 = jax.random.uniform(k1, (D, D), minval=-bound, maxval=bound, dtype=jnp.float32)
    b1 = jax.random.uniform(k2, (D,), minval=-bound, maxval=bound, dtype=jnp.float32)
    w2 = jax.random.uniform(k3, (D, D), minval=-bound, maxval=bound, dtype=jnp.float32)
    b2 = jax.random.uniform(k4, (D,), minval=-bound, maxval=bound, dtype=jnp.float32)

    params = prepare_params(w1, b1, w2, b2)   # transpose + bf16 cast, once

    out = jax.block_until_ready(projector_forward(x, params))
    assert out.shape == (M, D)
    assert out.dtype == x.dtype

    ref_bf = reference_forward(x, w1, b1, w2, b2, compute_dtype=jnp.bfloat16)
    ref_f32 = reference_forward(x, w1, b1, w2, b2)
    assert jnp.allclose(out, ref_bf, atol=1e-2, rtol=1e-2), "mismatch vs bf16 reference"
    assert jnp.allclose(out, ref_f32, atol=7e-2, rtol=7e-2), "mismatch vs f32 reference"

    # Remainder path: batch not divisible by the tile (partial last block is
    # handled by Pallas output masking -- no pad/slice copies).
    M2 = 40
    x2 = jax.random.normal(kx, (M2, D), dtype=jnp.float32)
    out2 = jax.block_until_ready(projector_forward(x2, params))
    ref2 = reference_forward(x2, w1, b1, w2, b2, compute_dtype=jnp.bfloat16)
    assert out2.shape == (M2, D)
    assert jnp.allclose(out2, ref2, atol=1e-2, rtol=1e-2), "mismatch (remainder case)"

    print("KERNEL_OK")
</pallas_src>

<mosaic_0001>
module attributes {stable_mosaic.version = 11 : i64} {
  func.func @projector_kernel(%arg0: i32, %arg1: memref<128x128xf32, #tpu.memory_space<vmem>>, %arg2: memref<128x128xbf16, #tpu.memory_space<vmem>>, %arg3: memref<1x128xf32, #tpu.memory_space<vmem>>, %arg4: memref<128x128xbf16, #tpu.memory_space<vmem>>, %arg5: memref<1x128xf32, #tpu.memory_space<vmem>>, %arg6: memref<128x128xf32, #tpu.memory_space<vmem>>) attributes {dimension_semantics = [#tpu.dimension_semantics<parallel>], iteration_bounds = array<i64: 2>, scalar_prefetch = 0 : i64, scratch_operands = 0 : i64, tpu.core_type = #tpu.core_type<tc>, window_params = [{transform_indices = @transform_0, window_bounds = array<i64: 128, 128>}, {pipeline_mode = #tpu.pipeline_mode<synchronous>, transform_indices = @transform_1, window_bounds = array<i64: 128, 128>}, {pipeline_mode = #tpu.pipeline_mode<synchronous>, transform_indices = @transform_2, window_bounds = array<i64: 1, 128>}, {pipeline_mode = #tpu.pipeline_mode<synchronous>, transform_indices = @transform_3, window_bounds = array<i64: 128, 128>}, {pipeline_mode = #tpu.pipeline_mode<synchronous>, transform_indices = @transform_4, window_bounds = array<i64: 1, 128>}, {transform_indices = @transform_5, window_bounds = array<i64: 128, 128>}]} {
    %c0 = arith.constant 0 : index
    %c0_0 = arith.constant 0 : index
    %0 = vector.load %arg1[%c0, %c0_0] : memref<128x128xf32, #tpu.memory_space<vmem>>, vector<128x128xf32>
    %1 = arith.truncf %0 : vector<128x128xf32> to vector<128x128xbf16>
    %c0_1 = arith.constant 0 : index
    %c0_2 = arith.constant 0 : index
    %2 = vector.load %arg2[%c0_1, %c0_2] : memref<128x128xbf16, #tpu.memory_space<vmem>>, vector<128x128xbf16>
    %cst = arith.constant dense<0.000000e+00> : vector<128x128xf32>
    %3 = tpu.matmul %1, %2, %cst {dimension_numbers = #tpu.dot_dimension_numbers<[1], [0], [0], [1], [0, 0, 1, 1], [], []>} : vector<128x128xbf16>, vector<128x128xbf16>, vector<128x128xf32> -> vector<128x128xf32>
    %c0_3 = arith.constant 0 : index
    %c0_4 = arith.constant 0 : index
    %4 = vector.load %arg3[%c0_3, %c0_4] : memref<1x128xf32, #tpu.memory_space<vmem>>, vector<1x128xf32>
    %5 = vector.broadcast %4 : vector<1x128xf32> to vector<128x128xf32>
    %6 = arith.addf %3, %5 : vector<128x128xf32>
    %cst_5 = arith.constant 0.000000e+00 : f32
    %7 = vector.broadcast %cst_5 : f32 to vector<128x128xf32>
    %8 = arith.maximumf %6, %7 : vector<128x128xf32>
    %9 = arith.truncf %8 : vector<128x128xf32> to vector<128x128xbf16>
    %c0_6 = arith.constant 0 : index
    %c0_7 = arith.constant 0 : index
    %10 = vector.load %arg4[%c0_6, %c0_7] : memref<128x128xbf16, #tpu.memory_space<vmem>>, vector<128x128xbf16>
    %cst_8 = arith.constant dense<0.000000e+00> : vector<128x128xf32>
    %11 = tpu.matmul %9, %10, %cst_8 {dimension_numbers = #tpu.dot_dimension_numbers<[1], [0], [0], [1], [0, 0, 1, 1], [], []>} : vector<128x128xbf16>, vector<128x128xbf16>, vector<128x128xf32> -> vector<128x128xf32>
    %c0_9 = arith.constant 0 : index
    %c0_10 = arith.constant 0 : index
    %12 = vector.load %arg5[%c0_9, %c0_10] : memref<1x128xf32, #tpu.memory_space<vmem>>, vector<1x128xf32>
    %13 = vector.broadcast %12 : vector<1x128xf32> to vector<128x128xf32>
    %14 = arith.addf %11, %13 : vector<128x128xf32>
    %c0_11 = arith.constant 0 : index
    %c0_12 = arith.constant 0 : index
    %15 = vector.load %arg6[%c0_11, %c0_12] : memref<128x128xf32, #tpu.memory_space<vmem>>, vector<128x128xf32>
    tpu.vector_store %arg6[%c0_11, %c0_12], %14 {strides = array<i32>} : memref<128x128xf32, #tpu.memory_space<vmem>>, vector<128x128xf32>,
    return
  }
  func.func @transform_0(%arg0: i32) -> (i32, i32) {
    %c0_i32 = arith.constant 0 : i32
    %c0_i32_0 = arith.constant 0 : i32
    return %arg0, %c0_i32 : i32, i32
  }
  func.func @transform_1(%arg0: i32) -> (i32, i32) {
    %c0_i32 = arith.constant 0 : i32
    %c0_i32_0 = arith.constant 0 : i32
    %c0_i32_1 = arith.constant 0 : i32
    return %c0_i32, %c0_i32_0 : i32, i32
  }
  func.func @transform_2(%arg0: i32) -> (i32, i32) {
    %c0_i32 = arith.constant 0 : i32
    %c0_i32_0 = arith.constant 0 : i32
    %c0_i32_1 = arith.constant 0 : i32
    return %c0_i32, %c0_i32_0 : i32, i32
  }
  func.func @transform_3(%arg0: i32) -> (i32, i32) {
    %c0_i32 = arith.constant 0 : i32
    %c0_i32_0 = arith.constant 0 : i32
    %c0_i32_1 = arith.constant 0 : i32
    return %c0_i32, %c0_i32_0 : i32, i32
  }
  func.func @transform_4(%arg0: i32) -> (i32, i32) {
    %c0_i32 = arith.constant 0 : i32
    %c0_i32_0 = arith.constant 0 : i32
    %c0_i32_1 = arith.constant 0 : i32
    return %c0_i32, %c0_i32_0 : i32, i32
  }
  func.func @transform_5(%arg0: i32) -> (i32, i32) {
    %c0_i32 = arith.constant 0 : i32
    %c0_i32_0 = arith.constant 0 : i32
    return %arg0, %c0_i32 : i32, i32
  }
}

module attributes {stable_mosaic.version = 11 : i64} {
  func.func @projector_kernel(%arg0: i32, %arg1: memref<128x128xf32, #tpu.memory_space<vmem>>, %arg2: memref<128x128xbf16, #tpu.memory_space<vmem>>, %arg3: memref<1x128xf32, #tpu.memory_space<vmem>>, %arg4: memref<128x128xbf16, #tpu.memory_space<vmem>>, %arg5: memref<1x128xf32, #tpu.memory_space<vmem>>, %arg6: memref<128x128xf32, #tpu.memory_space<vmem>>) attributes {dimension_semantics = [#tpu.dimension_semantics<parallel>], iteration_bounds = array<i64: 2>, scalar_prefetch = 0 : i64, scratch_operands = 0 : i64, tpu.core_type = #tpu.core_type<tc>, window_params = [{transform_indices = @transform_0, window_bounds = array<i64: 128, 128>}, {pipeline_mode = #tpu.pipeline_mode<synchronous>, transform_indices = @transform_1, window_bounds = array<i64: 128, 128>}, {pipeline_mode = #tpu.pipeline_mode<synchronous>, transform_indices = @transform_2, window_bounds = array<i64: 1, 128>}, {pipeline_mode = #tpu.pipeline_mode<synchronous>, transform_indices = @transform_3, window_bounds = array<i64: 128, 128>}, {pipeline_mode = #tpu.pipeline_mode<synchronous>, transform_indices = @transform_4, window_bounds = array<i64: 1, 128>}, {transform_indices = @transform_5, window_bounds = array<i64: 128, 128>}]} {
    %c0 = arith.constant 0 : index
    %c0_0 = arith.constant 0 : index
    %0 = vector.load %arg1[%c0, %c0_0] : memref<128x128xf32, #tpu.memory_space<vmem>>, vector<128x128xf32>
    %1 = arith.truncf %0 : vector<128x128xf32> to vector<128x128xbf16>
    %c0_1 = arith.constant 0 : index
    %c0_2 = arith.constant 0 : index
    %2 = vector.load %arg2[%c0_1, %c0_2] : memref<128x128xbf16, #tpu.memory_space<vmem>>, vector<128x128xbf16>
    %cst = arith.constant dense<0.000000e+00> : vector<128x128xf32>
    %3 = tpu.matmul %1, %2, %cst {dimension_numbers = #tpu.dot_dimension_numbers<[1], [0], [0], [1], [0, 0, 1, 1], [], []>} : vector<128x128xbf16>, vector<128x128xbf16>, vector<128x128xf32> -> vector<128x128xf32>
    %c0_3 = arith.constant 0 : index
    %c0_4 = arith.constant 0 : index
    %4 = vector.load %arg3[%c0_3, %c0_4] : memref<1x128xf32, #tpu.memory_space<vmem>>, vector<1x128xf32>
    %5 = vector.broadcast %4 : vector<1x128xf32> to vector<128x128xf32>
    %6 = arith.addf %3, %5 : vector<128x128xf32>
    %cst_5 = arith.constant 0.000000e+00 : f32
    %7 = vector.broadcast %cst_5 : f32 to vector<128x128xf32>
    %8 = arith.maximumf %6, %7 : vector<128x128xf32>
    %9 = arith.truncf %8 : vector<128x128xf32> to vector<128x128xbf16>
    %c0_6 = arith.constant 0 : index
    %c0_7 = arith.constant 0 : index
    %10 = vector.load %arg4[%c0_6, %c0_7] : memref<128x128xbf16, #tpu.memory_space<vmem>>, vector<128x128xbf16>
    %cst_8 = arith.constant dense<0.000000e+00> : vector<128x128xf32>
    %11 = tpu.matmul %9, %10, %cst_8 {dimension_numbers = #tpu.dot_dimension_numbers<[1], [0], [0], [1], [0, 0, 1, 1], [], []>} : vector<128x128xbf16>, vector<128x128xbf16>, vector<128x128xf32> -> vector<128x128xf32>
    %c0_9 = arith.constant 0 : index
    %c0_10 = arith.constant 0 : index
    %12 = vector.load %arg5[%c0_9, %c0_10] : memref<1x128xf32, #tpu.memory_space<vmem>>, vector<1x128xf32>
    %13 = vector.broadcast %12 : vector<1x128xf32> to vector<128x128xf32>
    %14 = arith.addf %11, %13 : vector<128x128xf32>
    %c0_11 = arith.constant 0 : index
    %c0_12 = arith.constant 0 : index
    %15 = vector.load %arg6[%c0_11, %c0_12] : memref<128x128xf32, #tpu.memory_space<vmem>>, vector<128x128xf32>
    tpu.vector_store %arg6[%c0_11, %c0_12], %14 {strides = array<i32>} : memref<128x128xf32, #tpu.memory_space<vmem>>, vector<128x128xf32>,
    return
  }
  func.func @transform_0(%arg0: i32) -> (i32, i32) {
    %c0_i32 = arith.constant 0 : i32
    %c0_i32_0 = arith.constant 0 : i32
    return %arg0, %c0_i32 : i32, i32
  }
  func.func @transform_1(%arg0: i32) -> (i32, i32) {
    %c0_i32 = arith.constant 0 : i32
    %c0_i32_0 = arith.constant 0 : i32
    %c0_i32_1 = arith.constant 0 : i32
    return %c0_i32, %c0_i32_0 : i32, i32
  }
  func.func @transform_2(%arg0: i32) -> (i32, i32) {
    %c0_i32 = arith.constant 0 : i32
    %c0_i32_0 = arith.constant 0 : i32
    %c0_i32_1 = arith.constant 0 : i32
    return %c0_i32, %c0_i32_0 : i32, i32
  }
  func.func @transform_3(%arg0: i32) -> (i32, i32) {
    %c0_i32 = arith.constant 0 : i32
    %c0_i32_0 = arith.constant 0 : i32
    %c0_i32_1 = arith.constant 0 : i32
    return %c0_i32, %c0_i32_0 : i32, i32
  }
  func.func @transform_4(%arg0: i32) -> (i32, i32) {
    %c0_i32 = arith.constant 0 : i32
    %c0_i32_0 = arith.constant 0 : i32
    %c0_i32_1 = arith.constant 0 : i32
    return %c0_i32, %c0_i32_0 : i32, i32
  }
  func.func @transform_5(%arg0: i32) -> (i32, i32) {
    %c0_i32 = arith.constant 0 : i32
    %c0_i32_0 = arith.constant 0 : i32
    return %arg0, %c0_i32 : i32, i32
  }
}

</mosaic_0001>

<llo_original>
// kernel: tpu_custom_call.1
$region0: #{tpu_custom_call.1}
  #allocation0 [shape = 'u32[]', space=smem, size = 0x4, offset = 0x4, fixed_abs, tag = 'smem constant byte address 0x4 - core index']
  #allocation1 [shape = 'u32[72,128]{1,0:T(1,128)}', space=vmem, size = 0x9000, scoped, tag = 'internal scratch']
  %s0 = inlined_call_operand.hbm [shape: f32[256,128], index: 0, kind: input, shape index: {}]
  %s1 = inlined_call_operand.hbm [shape: bf16[128,128], index: 1, kind: input, shape index: {}]
  %s2 = inlined_call_operand.vmem [shape: f32[1,128], index: 2, kind: input, shape index: {}]
  %s3 = inlined_call_operand.hbm [shape: bf16[128,128], index: 3, kind: input, shape index: {}]
  %s4 = inlined_call_operand.vmem [shape: f32[1,128], index: 4, kind: input, shape index: {}]
  %s5 = inlined_call_operand.hbm [shape: f32[256,128], index: 5, kind: output, shape index: {}]
  %s6 = sld [smem:[#allocation0]]
  $region65: #{tpu_custom_call.1} parent=0
    _
  %s8 = ssub.s32 1, %s6
  %s9 = scalar_select 0, %s8, %s6
  $region1: #{tpu_custom_call.1} parent=0
    #allocation2 [shape = 'u8[131072]{0}', space=vmem, size = 0x20000, scoped, tag = 'input window, operand 0']
    #allocation3 [shape = 's32[2]{0}', space=sflag, size = 0x8, scoped, tag = 'scoped memory for tpu_custom_call.1']
    #allocation4 [shape = 's32[2]{0}', space=sflag, size = 0x8, scoped, tag = 'scoped memory for tpu_custom_call.1']
    #allocation5 [shape = 'u8[32768]{0}', space=vmem, size = 0x8000, scoped, tag = 'input window, operand 1, single buffered']
    #allocation6 [shape = 's32[1]{0}', space=sflag, size = 0x4, scoped, tag = 'scoped memory for tpu_custom_call.1']
    #allocation7 [shape = 'u8[32768]{0}', space=vmem, size = 0x8000, scoped, tag = 'input window, operand 3, single buffered']
    #allocation8 [shape = 'u8[131072]{0}', space=vmem, size = 0x20000, scoped, tag = 'output window, operand 0']
    %10 = vsyncpa [#allocation3], 0
    %s11 = scalar_lea.sflag [#allocation3], 1
    %12 = vsyncpa %s11, 0
    %13 = vsyncpa [#allocation6], 0
    %14 = vsyncpa [#allocation4], 0
    %s15 = scalar_lea.sflag [#allocation4], 1
    %16 = vsyncpa %s15, 0
    loop: start=0, step=1, limit=4
    $region2: #{tpu_custom_call.1} parent=1 // loop_pre_header
      _
    $region3: #{tpu_custom_call.1} parent=1 // loop_header
      %s18 = sphi 0, %s22
      %p19 = scmp.ge.s32.totalorder %s18, 4
      %s28 = sphi 0, %s30
      %s31 = sphi 0, %s28
      %s32 = sphi 0, %s31
      %s48 = sphi 0, %s32
      %s52 = sphi 0, %s52
      %s54 = sphi 0, %s52
      %s55 = sphi 0, %s54
      %s69 = sphi 0, %s55
      %s73 = sphi 0, %s73
      %s75 = sphi 0, %s73
      %s76 = sphi 0, %s75
      %s90 = sphi 0, %s76
      %s94 = sphi 0, %s94
      %s96 = sphi 0, %s94
      %s97 = sphi 0, %s96
      %s111 = sphi 0, %s97
      %s115 = sphi 0, %s115
      %s117 = sphi 0, %s115
      %s118 = sphi 0, %s117
      %s132 = sphi 0, %s118
      %s138 = sphi 0, %s140
      %s141 = sphi 0, %s138
      %s142 = sphi 0, %s141
      %s158 = sphi 0, %s142
    $region4: #{tpu_custom_call.1} parent=1 // loop_header_branch
      %21 = sbr.rel (%p19) target = $region8
    $region5: #{tpu_custom_call.1} parent=1 // loop_body
      %s23 = ssub.s32 %s18, 1
      %s24 = ssub.s32 %s18, 2
      %s25 = sadd.s32 %s18, 1
      %s26 = ssub.s32 %s18, %s25
      %p27 = scmp.eq.s32.totalorder %s26, 0
      %s29 = sadd.s32 %s28, 1
      %s30 = scalar_select %p27, %s28, %s29
      %p33 = pneg %p27
      %p34 = scmp.eq.s32.totalorder %s18, 1
      %p35 = por %p33, %p34
      %p36 = scmp.ne.s32.totalorder %s28, %s31
      %p37 = scmp.eq.s32.totalorder %s18, 0
      %p38 = por %p36, %p37
      %p39 = scmp.ne.s32.totalorder %s28, %s31
      %p40 = scmp.eq.s32.totalorder %s23, 1
      %p41 = por %p39, %p40
      %p42 = scmp.ne.s32.totalorder %s31, %s32
      %p43 = scmp.eq.s32.totalorder %s23, 0
      %p44 = por %p42, %p43
      %p45 = scmp.ne.s32.totalorder %s31, %s32
      %p46 = scmp.eq.s32.totalorder %s24, 1
      %p47 = por %p45, %p46
      %p49 = scmp.ne.s32.totalorder %s32, %s48
      %p50 = scmp.eq.s32.totalorder %s24, 0
      %p51 = por %p49, %p50
      %s53 = sadd.s32 %s52, 1
      %p56 = scmp.eq.s32.totalorder %s18, 1
      %p57 = scmp.ne.s32.totalorder %s52, %s54
      %p58 = scmp.eq.s32.totalorder %s18, 0
      %p59 = por %p57, %p58
      %p60 = scmp.ne.s32.totalorder %s52, %s54
      %p61 = scmp.eq.s32.totalorder %s23, 1
      %p62 = por %p60, %p61
      %p63 = scmp.ne.s32.totalorder %s54, %s55
      %p64 = scmp.eq.s32.totalorder %s23, 0
      %p65 = por %p63, %p64
      %p66 = scmp.ne.s32.totalorder %s54, %s55
      %p67 = scmp.eq.s32.totalorder %s24, 1
      %p68 = por %p66, %p67
      %p70 = scmp.ne.s32.totalorder %s55, %s69
      %p71 = scmp.eq.s32.totalorder %s24, 0
      %p72 = por %p70, %p71
      %s74 = sadd.s32 %s73, 1
      %p77 = scmp.eq.s32.totalorder %s18, 1
      %p78 = scmp.ne.s32.totalorder %s73, %s75
      %p79 = scmp.eq.s32.totalorder %s18, 0
      %p80 = por %p78, %p79
      %p81 = scmp.ne.s32.totalorder %s73, %s75
      %p82 = scmp.eq.s32.totalorder %s23, 1
      %p83 = por %p81, %p82
      %p84 = scmp.ne.s32.totalorder %s75, %s76
      %p85 = scmp.eq.s32.totalorder %s23, 0
      %p86 = por %p84, %p85
      %p87 = scmp.ne.s32.totalorder %s75, %s76
      %p88 = scmp.eq.s32.totalorder %s24, 1
      %p89 = por %p87, %p88
      %p91 = scmp.ne.s32.totalorder %s76, %s90
      %p92 = scmp.eq.s32.totalorder %s24, 0
      %p93 = por %p91, %p92
      %s95 = sadd.s32 %s94, 1
      %p98 = scmp.eq.s32.totalorder %s18, 1
      %p99 = scmp.ne.s32.totalorder %s94, %s96
      %p100 = scmp.eq.s32.totalorder %s18, 0
      %p101 = por %p99, %p100
      %p102 = scmp.ne.s32.totalorder %s94, %s96
      %p103 = scmp.eq.s32.totalorder %s23, 1
      %p104 = por %p102, %p103
      %p105 = scmp.ne.s32.totalorder %s96, %s97
      %p106 = scmp.eq.s32.totalorder %s23, 0
      %p107 = por %p105, %p106
      %p108 = scmp.ne.s32.totalorder %s96, %s97
      %p109 = scmp.eq.s32.totalorder %s24, 1
      %p110 = por %p108, %p109
      %p112 = scmp.ne.s32.totalorder %s97, %s111
      %p113 = scmp.eq.s32.totalorder %s24, 0
      %p114 = por %p112, %p113
      %s116 = sadd.s32 %s115, 1
      %p119 = scmp.eq.s32.totalorder %s18, 1
      %p120 = scmp.ne.s32.totalorder %s115, %s117
      %p121 = scmp.eq.s32.totalorder %s18, 0
      %p122 = por %p120, %p121
      %p123 = scmp.ne.s32.totalorder %s115, %s117
      %p124 = scmp.eq.s32.totalorder %s23, 1
      %p125 = por %p123, %p124
      %p126 = scmp.ne.s32.totalorder %s117, %s118
      %p127 = scmp.eq.s32.totalorder %s23, 0
      %p128 = por %p126, %p127
      %p129 = scmp.ne.s32.totalorder %s117, %s118
      %p130 = scmp.eq.s32.totalorder %s24, 1
      %p131 = por %p129, %p130
      %p133 = scmp.ne.s32.totalorder %s118, %s132
      %p134 = scmp.eq.s32.totalorder %s24, 0
      %p135 = por %p133, %p134
      %s136 = ssub.s32 %s18, %s25
      %p137 = scmp.eq.s32.totalorder %s136, 0
      %s139 = sadd.s32 %s138, 1
      %s140 = scalar_select %p137, %s138, %s139
      %p143 = pneg %p137
      %p144 = scmp.eq.s32.totalorder %s18, 1
      %p145 = por %p143, %p144
      %p146 = scmp.ne.s32.totalorder %s138, %s141
      %p147 = scmp.eq.s32.totalorder %s18, 0
      %p148 = por %p146, %p147
      %p149 = scmp.ne.s32.totalorder %s138, %s141
      %p150 = scmp.eq.s32.totalorder %s23, 1
      %p151 = por %p149, %p150
      %p152 = scmp.ne.s32.totalorder %s141, %s142
      %p153 = scmp.eq.s32.totalorder %s23, 0
      %p154 = por %p152, %p153
      %p155 = scmp.ne.s32.totalorder %s141, %s142
      %p156 = scmp.eq.s32.totalorder %s24, 1
      %p157 = por %p155, %p156
      %p159 = scmp.ne.s32.totalorder %s142, %s158
      %p160 = scmp.eq.s32.totalorder %s24, 0
      %p161 = por %p159, %p160
      %p162 = scmp.le.s32.totalorder 1, %s18
      %p163 = scmp.lt.s32.totalorder %s18, 3
      %p164 = pnand %p162, %p163
      %p165 = pneg %p164
      // Predicated region
      $region9: #{tpu_custom_call.1} parent=5 // pred_check
        _
      $region10: #{tpu_custom_call.1} parent=5 // pred_check_branch
        %167 = sbr.rel (%p164) target = $region12
      $region11: #{tpu_custom_call.1} parent=5 // pred_region
        %s168 = ssub.s32 %s18, 1
        // Predicated region
        $region13: #{tpu_custom_call.1} parent=11 // pred_check
          %p169 = pneg %p65
        $region14: #{tpu_custom_call.1} parent=11 // pred_check_branch
          %171 = sbr.rel (%p169) target = $region16
        $region15: #{tpu_custom_call.1} parent=11 // pred_region
          %173 = vsyncadd [#allocation6], 0
          %s174 = sshll.u32 %s1, 4
          %s175 = int_to_ptr.hbm [resolvable:$true] %s174
          %s176 = sshll.u32 [#allocation5], 4
          %s177 = int_to_ptr.vmem [resolvable:$true] %s176
          %182 = dma.hbm_to_vmem [thread:$0]  %s175, 1024, %s177, [#allocation6], 64, 64, 4
        $region16: #{tpu_custom_call.1} parent=11 // pred_fallthru
          _
        // Predicated region
        $region17: #{tpu_custom_call.1} parent=11 // pred_check
          %p183 = pneg %p86
        $region18: #{tpu_custom_call.1} parent=11 // pred_check_branch
          %185 = sbr.rel (%p183) target = $region20
        $region19: #{tpu_custom_call.1} parent=11 // pred_region
          _
        $region20: #{tpu_custom_call.1} parent=11 // pred_fallthru
          _
        // Predicated region
        $region21: #{tpu_custom_call.1} parent=11 // pred_check
          %p186 = pneg %p107
        $region22: #{tpu_custom_call.1} parent=11 // pred_check_branch
          %188 = sbr.rel (%p186) target = $region24
        $region23: #{tpu_custom_call.1} parent=11 // pred_region
          %190 = vsyncadd [#allocation6], 0
          %s191 = sshll.u32 %s3, 4
          %s192 = int_to_ptr.hbm [resolvable:$true] %s191
          %s193 = sshll.u32 [#allocation7], 4
          %s194 = int_to_ptr.vmem [resolvable:$true] %s193
          %199 = dma.hbm_to_vmem [thread:$0]  %s192, 1024, %s194, [#allocation6], 64, 64, 4
        $region24: #{tpu_custom_call.1} parent=11 // pred_fallthru
          _
        // Predicated region
        $region25: #{tpu_custom_call.1} parent=11 // pred_check
          %p200 = pneg %p128
        $region26: #{tpu_custom_call.1} parent=11 // pred_check_branch
          %202 = sbr.rel (%p200) target = $region28
        $region27: #{tpu_custom_call.1} parent=11 // pred_region
          _
        $region28: #{tpu_custom_call.1} parent=11 // pred_fallthru
          _
      $region12: #{tpu_custom_call.1} parent=5 // pred_fallthru
        _
      %p203 = scmp.lt.s32.totalorder %s18, 2
      // Predicated region
      $region29: #{tpu_custom_call.1} parent=5 // pred_check
        %p204 = pneg %p203
      $region30: #{tpu_custom_call.1} parent=5 // pred_check_branch
        %206 = sbr.rel (%p204) target = $region32
      $region31: #{tpu_custom_call.1} parent=5 // pred_region
        // Predicated region
        $region33: #{tpu_custom_call.1} parent=31 // pred_check
          %p207 = pneg %p38
        $region34: #{tpu_custom_call.1} parent=31 // pred_check_branch
          %209 = sbr.rel (%p207) target = $region36
        $region35: #{tpu_custom_call.1} parent=31 // pred_region
          %s210 = sand.u32 %s28, 1
          %s211 = scalar_lea.sflag [#allocation3], %s210
          %s212 = sand.u32 %s28, 1
          %s213 = smul.addr %s212, 128
          %s214 = scalar_lea.vmem [#allocation2], %s213
          %s215 = smul.u32 16, %s18
          %217 = vsyncadd %s211, 0
          %s218 = smul.addr %s215, 8
          %s219 = scalar_lea.hbm %s0, %s218
          %s220 = sshll.u32 %s219, 4
          %s221 = int_to_ptr.hbm [resolvable:$true] %s220
          %s222 = sshll.u32 %s214, 4
          %s223 = int_to_ptr.vmem [resolvable:$true] %s222
          %228 = dma.hbm_to_vmem [thread:$0]  %s221, 2048, %s223, %s211, 128, 128, 8
        $region36: #{tpu_custom_call.1} parent=31 // pred_fallthru
          _
      $region32: #{tpu_custom_call.1} parent=5 // pred_fallthru
        _
      %p229 = scmp.le.s32.totalorder 1, %s18
      %p230 = scmp.lt.s32.totalorder %s18, 3
      %p231 = pnand %p229, %p230
      %p232 = pneg %p231
      // Predicated region
      $region37: #{tpu_custom_call.1} parent=5 // pred_check
        _
      $region38: #{tpu_custom_call.1} parent=5 // pred_check_branch
        %234 = sbr.rel (%p231) target = $region40
      $region39: #{tpu_custom_call.1} parent=5 // pred_region
        %s235 = ssub.s32 %s18, 1
        %s236 = sand.u32 %s31, 1
        %s237 = scalar_lea.sflag [#allocation3], %s236
        %s238 = sand.u32 %s31, 1
        %s239 = smul.addr %s238, 128
        %s240 = scalar_lea.vmem [#allocation2], %s239
        // Predicated region
        $region41: #{tpu_custom_call.1} parent=39 // pred_check
          %p241 = pneg %p44
        $region42: #{tpu_custom_call.1} parent=39 // pred_check_branch
          %243 = sbr.rel (%p241) target = $region44
        $region43: #{tpu_custom_call.1} parent=39 // pred_region
          %245 = dma.done %s237, 2048
        $region44: #{tpu_custom_call.1} parent=39 // pred_fallthru
          _
        // Predicated region
        $region45: #{tpu_custom_call.1} parent=39 // pred_check
          %p246 = pneg %p65
        $region46: #{tpu_custom_call.1} parent=39 // pred_check_branch
          %248 = sbr.rel (%p246) target = $region48
        $region47: #{tpu_custom_call.1} parent=39 // pred_region
          %250 = dma.done [#allocation6], 1024
        $region48: #{tpu_custom_call.1} parent=39 // pred_fallthru
          _
        // Predicated region
        $region49: #{tpu_custom_call.1} parent=39 // pred_check
          %p251 = pneg %p107
        $region50: #{tpu_custom_call.1} parent=39 // pred_check_branch
          %253 = sbr.rel (%p251) target = $region52
        $region51: #{tpu_custom_call.1} parent=39 // pred_region
          %255 = dma.done [#allocation6], 1024
        $region52: #{tpu_custom_call.1} parent=39 // pred_fallthru
          _
        %s256 = sand.u32 %s31, 1
        %s257 = scalar_lea.sflag [#allocation3], %s256
        %s258 = sand.u32 %s31, 1
        %s259 = smul.addr %s258, 128
        %s260 = scalar_lea.vmem [#allocation2], %s259
        %p261 = pneg %p44
        %p262 = pneg %p41
        %p263 = pneg %p65
        %p264 = pneg %p62
        %p265 = pneg %p86
        %p266 = pneg %p83
        %p267 = pneg %p107
        %p268 = pneg %p104
        %p269 = pneg %p128
        %p270 = pneg %p125
        %p271 = pneg %p154
        %p272 = pneg %p151
        %s273 = sand.u32 %s141, 1
        %s274 = scalar_lea.sflag [#allocation4], %s273
        %s275 = sand.u32 %s141, 1
        %s276 = smul.addr %s275, 128
        %s277 = scalar_lea.vmem [#allocation8], %s276
        %s278 = smul.u32 16, %s23
        %s279 = smul.u32 16, %s23
        %v280 = vld [vmem:[%s240] sm:$0xff]
        %v281 = vld [vmem:[%s240 + $0x8] sm:$0xff]
        %v282 = vld [vmem:[%s240 + $0x10] sm:$0xff]
        %v283 = vld [vmem:[%s240 + $0x18] sm:$0xff]
        %v284 = vld [vmem:[%s240 + $0x20] sm:$0xff]
        %v285 = vld [vmem:[%s240 + $0x28] sm:$0xff]
        %v286 = vld [vmem:[%s240 + $0x30] sm:$0xff]
        %v287 = vld [vmem:[%s240 + $0x38] sm:$0xff]
        %v288 = vld [vmem:[%s240 + $0x40] sm:$0xff]
        %v289 = vld [vmem:[%s240 + $0x48] sm:$0xff]
        %v290 = vld [vmem:[%s240 + $0x50] sm:$0xff]
        %v291 = vld [vmem:[%s240 + $0x58] sm:$0xff]
        %v292 = vld [vmem:[%s240 + $0x60] sm:$0xff]
        %v293 = vld [vmem:[%s240 + $0x68] sm:$0xff]
        %v294 = vld [vmem:[%s240 + $0x70] sm:$0xff]
        %v295 = vld [vmem:[%s240 + $0x78] sm:$0xff]
        %v296 = vpack.c.bf16 %v281, %v280
        %v297 = vpack.c.bf16 %v283, %v282
        %v298 = vpack.c.bf16 %v285, %v284
        %v299 = vpack.c.bf16 %v287, %v286
        %v300 = vpack.c.bf16 %v289, %v288
        %v301 = vpack.c.bf16 %v291, %v290
        %v302 = vpack.c.bf16 %v293, %v292
        %v303 = vpack.c.bf16 %v295, %v294
        %v304 = vld [vmem:[#allocation5] sm:$0xf]
        %v305 = vld [vmem:[#allocation5 + $0x4] sm:$0xf]
        %v306 = vld [vmem:[#allocation5 + $0x8] sm:$0xf]
        %v307 = vld [vmem:[#allocation5 + $0xc] sm:$0xf]
        %v308 = vld [vmem:[#allocation5 + $0x10] sm:$0xf]
        %v309 = vld [vmem:[#allocation5 + $0x14] sm:$0xf]
        %v310 = vld [vmem:[#allocation5 + $0x18] sm:$0xf]
        %v311 = vld [vmem:[#allocation5 + $0x1c] sm:$0xf]
        %v312 = vld [vmem:[#allocation5 + $0x20] sm:$0xf]
        %v313 = vld [vmem:[#allocation5 + $0x24] sm:$0xf]
        %v314 = vld [vmem:[#allocation5 + $0x28] sm:$0xf]
        %v315 = vld [vmem:[#allocation5 + $0x2c] sm:$0xf]
        %v316 = vld [vmem:[#allocation5 + $0x30] sm:$0xf]
        %v317 = vld [vmem:[#allocation5 + $0x34] sm:$0xf]
        %v318 = vld [vmem:[#allocation5 + $0x38] sm:$0xf]
        %v319 = vld [vmem:[#allocation5 + $0x3c] sm:$0xf]
        %v320 = vld [vmem:[%s2] sm:$0x1]
        %v322 = vperm.slane %v320, 0
        %v340 = vunpack.c.l.b16 %v304
        %v341 = vunpack.c.l.b16 %v305
        %v342 = vunpack.c.l.b16 %v306
        %v343 = vunpack.c.l.b16 %v307
        %v344 = vunpack.c.l.b16 %v308
        %v345 = vunpack.c.l.b16 %v309
        %v346 = vunpack.c.l.b16 %v310
        %v347 = vunpack.c.l.b16 %v311
        %v348 = vunpack.c.l.b16 %v312
        %v349 = vunpack.c.l.b16 %v313
        %v350 = vunpack.c.l.b16 %v314
        %v351 = vunpack.c.l.b16 %v315
        %v352 = vunpack.c.l.b16 %v316
        %v353 = vunpack.c.l.b16 %v317
        %v354 = vunpack.c.l.b16 %v318
        %v355 = vunpack.c.l.b16 %v319
        %v356 = vpack.c.b16 %v341, %v340
        %v357 = vpack.c.b16 %v343, %v342
        %v358 = vpack.c.b16 %v345, %v344
        %v359 = vpack.c.b16 %v347, %v346
        %v360 = vpack.c.b16 %v349, %v348
        %v361 = vpack.c.b16 %v351, %v350
        %v362 = vpack.c.b16 %v353, %v352
        %v363 = vpack.c.b16 %v355, %v354
        %372 = vmatpush.bf16.msra.mxu0 %v363
        %373 = vmatpush.bf16.msra.mxu0 %v362
        %374 = vmatpush.bf16.msra.mxu0 %v361
        %375 = vmatpush.bf16.msra.mxu0 %v360
        %376 = vmatpush.bf16.msra.mxu0 %v359
        %377 = vmatpush.bf16.msra.mxu0 %v358
        %378 = vmatpush.bf16.msra.mxu0 %v357
        %379 = vmatpush.bf16.msra.mxu0 %v356
        %380 = vmatmul.bf16.gmra.mxu0 %v296
        %v381 = vpop.f32.mrf.mxu0
        %v382 = vadd.f32 %v322, %v381
        %v383 = vpop.f32.mrf.mxu0
        %v384 = vadd.f32 %v322, %v383
        %385 = vmatmul.bf16.gmra.mxu0 %v297
        %v386 = vpop.f32.mrf.mxu0
        %v387 = vadd.f32 %v322, %v386
        %v388 = vpop.f32.mrf.mxu0
        %v389 = vadd.f32 %v322, %v388
        %390 = vmatmul.bf16.gmra.mxu0 %v298
        %v391 = vpop.f32.mrf.mxu0
        %v392 = vadd.f32 %v322, %v391
        %v393 = vpop.f32.mrf.mxu0
        %v394 = vadd.f32 %v322, %v393
        %395 = vmatmul.bf16.gmra.mxu0 %v299
        %v396 = vpop.f32.mrf.mxu0
        %v397 = vadd.f32 %v322, %v396
        %v398 = vpop.f32.mrf.mxu0
        %v399 = vadd.f32 %v322, %v398
        %400 = vmatmul.bf16.gmra.mxu0 %v300
        %v401 = vpop.f32.mrf.mxu0
        %v402 = vadd.f32 %v322, %v401
        %v403 = vpop.f32.mrf.mxu0
        %v404 = vadd.f32 %v322, %v403
        %405 = vmatmul.bf16.gmra.mxu0 %v301
        %v406 = vpop.f32.mrf.mxu0
        %v407 = vadd.f32 %v322, %v406
        %v408 = vpop.f32.mrf.mxu0
        %v409 = vadd.f32 %v322, %v408
        %410 = vmatmul.bf16.gmra.mxu0 %v302
        %v411 = vpop.f32.mrf.mxu0
        %v412 = vadd.f32 %v322, %v411
        %v413 = vpop.f32.mrf.mxu0
        %v414 = vadd.f32 %v322, %v413
        %415 = vmatmul.bf16.gmra.mxu0 %v303
        %v416 = vpop.f32.mrf.mxu0
        %v417 = vadd.f32 %v322, %v416
        %v418 = vpop.f32.mrf.mxu0
        %v419 = vadd.f32 %v322, %v418
        %420 = vdwg.mxu0
        %v421 = vmax.f32 %v382, 0.0
        %v422 = vmax.f32 %v384, 0.0
        %v423 = vmax.f32 %v387, 0.0
        %v424 = vmax.f32 %v389, 0.0
        %v425 = vmax.f32 %v392, 0.0
        %v426 = vmax.f32 %v394, 0.0
        %v427 = vmax.f32 %v397, 0.0
        %v428 = vmax.f32 %v399, 0.0
        %v429 = vmax.f32 %v402, 0.0
        %v430 = vmax.f32 %v404, 0.0
        %v431 = vmax.f32 %v407, 0.0
        %v432 = vmax.f32 %v409, 0.0
        %v433 = vmax.f32 %v412, 0.0
        %v434 = vmax.f32 %v414, 0.0
        %v435 = vmax.f32 %v417, 0.0
        %v436 = vmax.f32 %v419, 0.0
        %v437 = vpack.c.bf16 %v422, %v421
        %v438 = vpack.c.bf16 %v424, %v423
        %v439 = vpack.c.bf16 %v426, %v425
        %v440 = vpack.c.bf16 %v428, %v427
        %v441 = vpack.c.bf16 %v430, %v429
        %v442 = vpack.c.bf16 %v432, %v431
        %v443 = vpack.c.bf16 %v434, %v433
        %v444 = vpack.c.bf16 %v436, %v435
        %v445 = vld [vmem:[#allocation7] sm:$0xf]
        %v446 = vld [vmem:[#allocation7 + $0x4] sm:$0xf]
        %v447 = vld [vmem:[#allocation7 + $0x8] sm:$0xf]
        %v448 = vld [vmem:[#allocation7 + $0xc] sm:$0xf]
        %v449 = vld [vmem:[#allocation7 + $0x10] sm:$0xf]
        %v450 = vld [vmem:[#allocation7 + $0x14] sm:$0xf]
        %v451 = vld [vmem:[#allocation7 + $0x18] sm:$0xf]
        %v452 = vld [vmem:[#allocation7 + $0x1c] sm:$0xf]
        %v453 = vld [vmem:[#allocation7 + $0x20] sm:$0xf]
        %v454 = vld [vmem:[#allocation7 + $0x24] sm:$0xf]
        %v455 = vld [vmem:[#allocation7 + $0x28] sm:$0xf]
        %v456 = vld [vmem:[#allocation7 + $0x2c] sm:$0xf]
        %v457 = vld [vmem:[#allocation7 + $0x30] sm:$0xf]
        %v458 = vld [vmem:[#allocation7 + $0x34] sm:$0xf]
        %v459 = vld [vmem:[#allocation7 + $0x38] sm:$0xf]
        %v460 = vld [vmem:[#allocation7 + $0x3c] sm:$0xf]
        %v461 = vld [vmem:[%s4] sm:$0x1]
        %v463 = vperm.slane %v461, 0
        %v481 = vunpack.c.l.b16 %v445
        %v482 = vunpack.c.l.b16 %v446
        %v483 = vunpack.c.l.b16 %v447
        %v484 = vunpack.c.l.b16 %v448
        %v485 = vunpack.c.l.b16 %v449
        %v486 = vunpack.c.l.b16 %v450
        %v487 = vunpack.c.l.b16 %v451
        %v488 = vunpack.c.l.b16 %v452
        %v489 = vunpack.c.l.b16 %v453
        %v490 = vunpack.c.l.b16 %v454
        %v491 = vunpack.c.l.b16 %v455
        %v492 = vunpack.c.l.b16 %v456
        %v493 = vunpack.c.l.b16 %v457
        %v494 = vunpack.c.l.b16 %v458
        %v495 = vunpack.c.l.b16 %v459
        %v496 = vunpack.c.l.b16 %v460
        %v497 = vpack.c.b16 %v482, %v481
        %v498 = vpack.c.b16 %v484, %v483
        %v499 = vpack.c.b16 %v486, %v485
        %v500 = vpack.c.b16 %v488, %v487
        %v501 = vpack.c.b16 %v490, %v489
        %v502 = vpack.c.b16 %v492, %v491
        %v503 = vpack.c.b16 %v494, %v493
        %v504 = vpack.c.b16 %v496, %v495
        %513 = vmatpush.bf16.msra.mxu0 %v504
        %514 = vmatpush.bf16.msra.mxu0 %v503
        %515 = vmatpush.bf16.msra.mxu0 %v502
        %516 = vmatpush.bf16.msra.mxu0 %v501
        %517 = vmatpush.bf16.msra.mxu0 %v500
        %518 = vmatpush.bf16.msra.mxu0 %v499
        %519 = vmatpush.bf16.msra.mxu0 %v498
        %520 = vmatpush.bf16.msra.mxu0 %v497
        %521 = vmatmul.bf16.gmra.mxu0 %v437
        %v522 = vpop.f32.mrf.mxu0
        %v523 = vadd.f32 %v463, %v522
        %v524 = vpop.f32.mrf.mxu0
        %v525 = vadd.f32 %v463, %v524
        %526 = vmatmul.bf16.gmra.mxu0 %v438
        %v527 = vpop.f32.mrf.mxu0
        %v528 = vadd.f32 %v463, %v527
        %v529 = vpop.f32.mrf.mxu0
        %v530 = vadd.f32 %v463, %v529
        %531 = vmatmul.bf16.gmra.mxu0 %v439
        %v532 = vpop.f32.mrf.mxu0
        %v533 = vadd.f32 %v463, %v532
        %v534 = vpop.f32.mrf.mxu0
        %v535 = vadd.f32 %v463, %v534
        %536 = vmatmul.bf16.gmra.mxu0 %v440
        %v537 = vpop.f32.mrf.mxu0
        %v538 = vadd.f32 %v463, %v537
        %v539 = vpop.f32.mrf.mxu0
        %v540 = vadd.f32 %v463, %v539
        %541 = vmatmul.bf16.gmra.mxu0 %v441
        %v542 = vpop.f32.mrf.mxu0
        %v543 = vadd.f32 %v463, %v542
        %v544 = vpop.f32.mrf.mxu0
        %v545 = vadd.f32 %v463, %v544
        %546 = vmatmul.bf16.gmra.mxu0 %v442
        %v547 = vpop.f32.mrf.mxu0
        %v548 = vadd.f32 %v463, %v547
        %v549 = vpop.f32.mrf.mxu0
        %v550 = vadd.f32 %v463, %v549
        %551 = vmatmul.bf16.gmra.mxu0 %v443
        %v552 = vpop.f32.mrf.mxu0
        %v553 = vadd.f32 %v463, %v552
        %v554 = vpop.f32.mrf.mxu0
        %v555 = vadd.f32 %v463, %v554
        %556 = vmatmul.bf16.gmra.mxu0 %v444
        %v557 = vpop.f32.mrf.mxu0
        %v558 = vadd.f32 %v463, %v557
        %v559 = vpop.f32.mrf.mxu0
        %v560 = vadd.f32 %v463, %v559
        %561 = vdwg.mxu0
        %562 = vst [vmem:[%s277] sm:$0xff] %v523
        %563 = vst [vmem:[%s277 + $0x8] sm:$0xff] %v525
        %564 = vst [vmem:[%s277 + $0x10] sm:$0xff] %v528
        %565 = vst [vmem:[%s277 + $0x18] sm:$0xff] %v530
        %566 = vst [vmem:[%s277 + $0x20] sm:$0xff] %v533
        %567 = vst [vmem:[%s277 + $0x28] sm:$0xff] %v535
        %568 = vst [vmem:[%s277 + $0x30] sm:$0xff] %v538
        %569 = vst [vmem:[%s277 + $0x38] sm:$0xff] %v540
        %570 = vst [vmem:[%s277 + $0x40] sm:$0xff] %v543
        %571 = vst [vmem:[%s277 + $0x48] sm:$0xff] %v545
        %572 = vst [vmem:[%s277 + $0x50] sm:$0xff] %v548
        %573 = vst [vmem:[%s277 + $0x58] sm:$0xff] %v550
        %574 = vst [vmem:[%s277 + $0x60] sm:$0xff] %v553
        %575 = vst [vmem:[%s277 + $0x68] sm:$0xff] %v555
        %576 = vst [vmem:[%s277 + $0x70] sm:$0xff] %v558
        %577 = vst [vmem:[%s277 + $0x78] sm:$0xff] %v560
        %s578 = sand.u32 %s141, 1
        %s579 = scalar_lea.sflag [#allocation4], %s578
        %s580 = sand.u32 %s141, 1
        %s581 = smul.addr %s580, 128
        %s582 = scalar_lea.vmem [#allocation8], %s581
        // Predicated region
        $region53: #{tpu_custom_call.1} parent=39 // pred_check
          %p583 = pneg %p151
        $region54: #{tpu_custom_call.1} parent=39 // pred_check_branch
          %585 = sbr.rel (%p583) target = $region56
        $region55: #{tpu_custom_call.1} parent=39 // pred_region
          %s586 = smul.u32 16, %s23
          %588 = vsyncadd %s579, 0
          %s589 = smul.addr %s586, 8
          %s590 = scalar_lea.hbm %s5, %s589
          %s591 = sshll.u32 %s582, 4
          %s592 = int_to_ptr.vmem [resolvable:$true] %s591
          %s593 = sshll.u32 %s590, 4
          %s594 = int_to_ptr.hbm [resolvable:$true] %s593
          %599 = dma.vmem_to_hbm [thread:$0]  %s592, 2048, %s594, %s579, 128, 128, 8
        $region56: #{tpu_custom_call.1} parent=39 // pred_fallthru
          _
      $region40: #{tpu_custom_call.1} parent=5 // pred_fallthru
        _
      %p600 = scmp.le.s32.totalorder 2, %s18
      // Predicated region
      $region57: #{tpu_custom_call.1} parent=5 // pred_check
        %p601 = pneg %p600
      $region58: #{tpu_custom_call.1} parent=5 // pred_check_branch
        %603 = sbr.rel (%p601) target = $region60
      $region59: #{tpu_custom_call.1} parent=5 // pred_region
        %s604 = ssub.s32 %s18, 2
        // Predicated region
        $region61: #{tpu_custom_call.1} parent=59 // pred_check
          %p605 = pneg %p157
        $region62: #{tpu_custom_call.1} parent=59 // pred_check_branch
          %607 = sbr.rel (%p605) target = $region64
        $region63: #{tpu_custom_call.1} parent=59 // pred_region
          %s608 = sand.u32 %s142, 1
          %s609 = scalar_lea.sflag [#allocation4], %s608
          %s610 = sand.u32 %s142, 1
          %s611 = smul.addr %s610, 128
          %s612 = scalar_lea.vmem [#allocation8], %s611
          %614 = dma.done %s609, 2048
        $region64: #{tpu_custom_call.1} parent=59 // pred_fallthru
          _
      $region60: #{tpu_custom_call.1} parent=5 // pred_fallthru
        _
    $region6: #{tpu_custom_call.1} parent=1 // loop_footer
      %s22 = sadd.s32 1, %s18
    $region7: #{tpu_custom_call.1} parent=1 // loop_footer_branch
      %17 = sbr.rel target = $region3
    $region8: #{tpu_custom_call.1} parent=1 // loop_exit
      _
    %615 = vsyncpa [#allocation3], 1
    %s616 = scalar_lea.sflag [#allocation3], 1
    %617 = vsyncpa %s616, 1
    %618 = vsyncpa [#allocation6], 1
    %619 = vsyncpa [#allocation4], 1
    %s620 = scalar_lea.sflag [#allocation4], 1
    %621 = vsyncpa %s620, 1

// kernel: tpu_custom_call.1
$region0: #{tpu_custom_call.1}
  #allocation0 [shape = 'u32[]', space=smem, size = 0x4, offset = 0x4, fixed_abs, tag = 'smem constant byte address 0x4 - core index']
  #allocation1 [shape = 'u32[72,128]{1,0:T(1,128)}', space=vmem, size = 0x9000, scoped, tag = 'internal scratch']
  %s0 = inlined_call_operand.hbm [shape: f32[256,128], index: 0, kind: input, shape index: {}]
  %s1 = inlined_call_operand.hbm [shape: bf16[128,128], index: 1, kind: input, shape index: {}]
  %s2 = inlined_call_operand.vmem [shape: f32[1,128], index: 2, kind: input, shape index: {}]
  %s3 = inlined_call_operand.hbm [shape: bf16[128,128], index: 3, kind: input, shape index: {}]
  %s4 = inlined_call_operand.vmem [shape: f32[1,128], index: 4, kind: input, shape index: {}]
  %s5 = inlined_call_operand.hbm [shape: f32[256,128], index: 5, kind: output, shape index: {}]
  %s6 = sld [smem:[#allocation0]]
  $region65: #{tpu_custom_call.1} parent=0
    _
  %s8 = ssub.s32 1, %s6
  %s9 = scalar_select 0, %s8, %s6
  $region1: #{tpu_custom_call.1} parent=0
    #allocation2 [shape = 'u8[131072]{0}', space=vmem, size = 0x20000, scoped, tag = 'input window, operand 0']
    #allocation3 [shape = 's32[2]{0}', space=sflag, size = 0x8, scoped, tag = 'scoped memory for tpu_custom_call.1']
    #allocation4 [shape = 's32[2]{0}', space=sflag, size = 0x8, scoped, tag = 'scoped memory for tpu_custom_call.1']
    #allocation5 [shape = 'u8[32768]{0}', space=vmem, size = 0x8000, scoped, tag = 'input window, operand 1, single buffered']
    #allocation6 [shape = 's32[1]{0}', space=sflag, size = 0x4, scoped, tag = 'scoped memory for tpu_custom_call.1']
    #allocation7 [shape = 'u8[32768]{0}', space=vmem, size = 0x8000, scoped, tag = 'input window, operand 3, single buffered']
    #allocation8 [shape = 'u8[131072]{0}', space=vmem, size = 0x20000, scoped, tag = 'output window, operand 0']
    %10 = vsyncpa [#allocation3], 0
    %s11 = scalar_lea.sflag [#allocation3], 1
    %12 = vsyncpa %s11, 0
    %13 = vsyncpa [#allocation6], 0
    %14 = vsyncpa [#allocation4], 0
    %s15 = scalar_lea.sflag [#allocation4], 1
    %16 = vsyncpa %s15, 0
    loop: start=0, step=1, limit=4
    $region2: #{tpu_custom_call.1} parent=1 // loop_pre_header
      _
    $region3: #{tpu_custom_call.1} parent=1 // loop_header
      %s18 = sphi 0, %s22
      %p19 = scmp.ge.s32.totalorder %s18, 4
      %s28 = sphi 0, %s30
      %s31 = sphi 0, %s28
      %s32 = sphi 0, %s31
      %s48 = sphi 0, %s32
      %s52 = sphi 0, %s52
      %s54 = sphi 0, %s52
      %s55 = sphi 0, %s54
      %s69 = sphi 0, %s55
      %s73 = sphi 0, %s73
      %s75 = sphi 0, %s73
      %s76 = sphi 0, %s75
      %s90 = sphi 0, %s76
      %s94 = sphi 0, %s94
      %s96 = sphi 0, %s94
      %s97 = sphi 0, %s96
      %s111 = sphi 0, %s97
      %s115 = sphi 0, %s115
      %s117 = sphi 0, %s115
      %s118 = sphi 0, %s117
      %s132 = sphi 0, %s118
      %s138 = sphi 0, %s140
      %s141 = sphi 0, %s138
      %s142 = sphi 0, %s141
      %s158 = sphi 0, %s142
    $region4: #{tpu_custom_call.1} parent=1 // loop_header_branch
      %21 = sbr.rel (%p19) target = $region8
    $region5: #{tpu_custom_call.1} parent=1 // loop_body
      %s23 = ssub.s32 %s18, 1
      %s24 = ssub.s32 %s18, 2
      %s25 = sadd.s32 %s18, 1
      %s26 = ssub.s32 %s18, %s25
      %p27 = scmp.eq.s32.totalorder %s26, 0
      %s29 = sadd.s32 %s28, 1
      %s30 = scalar_select %p27, %s28, %s29
      %p33 = pneg %p27
      %p34 = scmp.eq.s32.totalorder %s18, 1
      %p35 = por %p33, %p34
      %p36 = scmp.ne.s32.totalorder %s28, %s31
      %p37 = scmp.eq.s32.totalorder %s18, 0
      %p38 = por %p36, %p37
      %p39 = scmp.ne.s32.totalorder %s28, %s31
      %p40 = scmp.eq.s32.totalorder %s23, 1
      %p41 = por %p39, %p40
      %p42 = scmp.ne.s32.totalorder %s31, %s32
      %p43 = scmp.eq.s32.totalorder %s23, 0
      %p44 = por %p42, %p43
      %p45 = scmp.ne.s32.totalorder %s31, %s32
      %p46 = scmp.eq.s32.totalorder %s24, 1
      %p47 = por %p45, %p46
      %p49 = scmp.ne.s32.totalorder %s32, %s48
      %p50 = scmp.eq.s32.totalorder %s24, 0
      %p51 = por %p49, %p50
      %s53 = sadd.s32 %s52, 1
      %p56 = scmp.eq.s32.totalorder %s18, 1
      %p57 = scmp.ne.s32.totalorder %s52, %s54
      %p58 = scmp.eq.s32.totalorder %s18, 0
      %p59 = por %p57, %p58
      %p60 = scmp.ne.s32.totalorder %s52, %s54
      %p61 = scmp.eq.s32.totalorder %s23, 1
      %p62 = por %p60, %p61
      %p63 = scmp.ne.s32.totalorder %s54, %s55
      %p64 = scmp.eq.s32.totalorder %s23, 0
      %p65 = por %p63, %p64
      %p66 = scmp.ne.s32.totalorder %s54, %s55
      %p67 = scmp.eq.s32.totalorder %s24, 1
      %p68 = por %p66, %p67
      %p70 = scmp.ne.s32.totalorder %s55, %s69
      %p71 = scmp.eq.s32.totalorder %s24, 0
      %p72 = por %p70, %p71
      %s74 = sadd.s32 %s73, 1
      %p77 = scmp.eq.s32.totalorder %s18, 1
      %p78 = scmp.ne.s32.totalorder %s73, %s75
      %p79 = scmp.eq.s32.totalorder %s18, 0
      %p80 = por %p78, %p79
      %p81 = scmp.ne.s32.totalorder %s73, %s75
      %p82 = scmp.eq.s32.totalorder %s23, 1
      %p83 = por %p81, %p82
      %p84 = scmp.ne.s32.totalorder %s75, %s76
      %p85 = scmp.eq.s32.totalorder %s23, 0
      %p86 = por %p84, %p85
      %p87 = scmp.ne.s32.totalorder %s75, %s76
      %p88 = scmp.eq.s32.totalorder %s24, 1
      %p89 = por %p87, %p88
      %p91 = scmp.ne.s32.totalorder %s76, %s90
      %p92 = scmp.eq.s32.totalorder %s24, 0
      %p93 = por %p91, %p92
      %s95 = sadd.s32 %s94, 1
      %p98 = scmp.eq.s32.totalorder %s18, 1
      %p99 = scmp.ne.s32.totalorder %s94, %s96
      %p100 = scmp.eq.s32.totalorder %s18, 0
      %p101 = por %p99, %p100
      %p102 = scmp.ne.s32.totalorder %s94, %s96
      %p103 = scmp.eq.s32.totalorder %s23, 1
      %p104 = por %p102, %p103
      %p105 = scmp.ne.s32.totalorder %s96, %s97
      %p106 = scmp.eq.s32.totalorder %s23, 0
      %p107 = por %p105, %p106
      %p108 = scmp.ne.s32.totalorder %s96, %s97
      %p109 = scmp.eq.s32.totalorder %s24, 1
      %p110 = por %p108, %p109
      %p112 = scmp.ne.s32.totalorder %s97, %s111
      %p113 = scmp.eq.s32.totalorder %s24, 0
      %p114 = por %p112, %p113
      %s116 = sadd.s32 %s115, 1
      %p119 = scmp.eq.s32.totalorder %s18, 1
      %p120 = scmp.ne.s32.totalorder %s115, %s117
      %p121 = scmp.eq.s32.totalorder %s18, 0
      %p122 = por %p120, %p121
      %p123 = scmp.ne.s32.totalorder %s115, %s117
      %p124 = scmp.eq.s32.totalorder %s23, 1
      %p125 = por %p123, %p124
      %p126 = scmp.ne.s32.totalorder %s117, %s118
      %p127 = scmp.eq.s32.totalorder %s23, 0
      %p128 = por %p126, %p127
      %p129 = scmp.ne.s32.totalorder %s117, %s118
      %p130 = scmp.eq.s32.totalorder %s24, 1
      %p131 = por %p129, %p130
      %p133 = scmp.ne.s32.totalorder %s118, %s132
      %p134 = scmp.eq.s32.totalorder %s24, 0
      %p135 = por %p133, %p134
      %s136 = ssub.s32 %s18, %s25
      %p137 = scmp.eq.s32.totalorder %s136, 0
      %s139 = sadd.s32 %s138, 1
      %s140 = scalar_select %p137, %s138, %s139
      %p143 = pneg %p137
      %p144 = scmp.eq.s32.totalorder %s18, 1
      %p145 = por %p143, %p144
      %p146 = scmp.ne.s32.totalorder %s138, %s141
      %p147 = scmp.eq.s32.totalorder %s18, 0
      %p148 = por %p146, %p147
      %p149 = scmp.ne.s32.totalorder %s138, %s141
      %p150 = scmp.eq.s32.totalorder %s23, 1
      %p151 = por %p149, %p150
      %p152 = scmp.ne.s32.totalorder %s141, %s142
      %p153 = scmp.eq.s32.totalorder %s23, 0
      %p154 = por %p152, %p153
      %p155 = scmp.ne.s32.totalorder %s141, %s142
      %p156 = scmp.eq.s32.totalorder %s24, 1
      %p157 = por %p155, %p156
      %p159 = scmp.ne.s32.totalorder %s142, %s158
      %p160 = scmp.eq.s32.totalorder %s24, 0
      %p161 = por %p159, %p160
      %p162 = scmp.le.s32.totalorder 1, %s18
      %p163 = scmp.lt.s32.totalorder %s18, 3
      %p164 = pnand %p162, %p163
      %p165 = pneg %p164
      // Predicated region
      $region9: #{tpu_custom_call.1} parent=5 // pred_check
        _
      $region10: #{tpu_custom_call.1} parent=5 // pred_check_branch
        %167 = sbr.rel (%p164) target = $region12
      $region11: #{tpu_custom_call.1} parent=5 // pred_region
        %s168 = ssub.s32 %s18, 1
        // Predicated region
        $region13: #{tpu_custom_call.1} parent=11 // pred_check
          %p169 = pneg %p65
        $region14: #{tpu_custom_call.1} parent=11 // pred_check_branch
          %171 = sbr.rel (%p169) target = $region16
        $region15: #{tpu_custom_call.1} parent=11 // pred_region
          %173 = vsyncadd [#allocation6], 0
          %s174 = sshll.u32 %s1, 4
          %s175 = int_to_ptr.hbm [resolvable:$true] %s174
          %s176 = sshll.u32 [#allocation5], 4
          %s177 = int_to_ptr.vmem [resolvable:$true] %s176
          %182 = dma.hbm_to_vmem [thread:$0]  %s175, 1024, %s177, [#allocation6], 64, 64, 4
        $region16: #{tpu_custom_call.1} parent=11 // pred_fallthru
          _
        // Predicated region
        $region17: #{tpu_custom_call.1} parent=11 // pred_check
          %p183 = pneg %p86
        $region18: #{tpu_custom_call.1} parent=11 // pred_check_branch
          %185 = sbr.rel (%p183) target = $region20
        $region19: #{tpu_custom_call.1} parent=11 // pred_region
          _
        $region20: #{tpu_custom_call.1} parent=11 // pred_fallthru
          _
        // Predicated region
        $region21: #{tpu_custom_call.1} parent=11 // pred_check
          %p186 = pneg %p107
        $region22: #{tpu_custom_call.1} parent=11 // pred_check_branch
          %188 = sbr.rel (%p186) target = $region24
        $region23: #{tpu_custom_call.1} parent=11 // pred_region
          %190 = vsyncadd [#allocation6], 0
          %s191 = sshll.u32 %s3, 4
          %s192 = int_to_ptr.hbm [resolvable:$true] %s191
          %s193 = sshll.u32 [#allocation7], 4
          %s194 = int_to_ptr.vmem [resolvable:$true] %s193
          %199 = dma.hbm_to_vmem [thread:$0]  %s192, 1024, %s194, [#allocation6], 64, 64, 4
        $region24: #{tpu_custom_call.1} parent=11 // pred_fallthru
          _
        // Predicated region
        $region25: #{tpu_custom_call.1} parent=11 // pred_check
          %p200 = pneg %p128
        $region26: #{tpu_custom_call.1} parent=11 // pred_check_branch
          %202 = sbr.rel (%p200) target = $region28
        $region27: #{tpu_custom_call.1} parent=11 // pred_region
          _
        $region28: #{tpu_custom_call.1} parent=11 // pred_fallthru
          _
      $region12: #{tpu_custom_call.1} parent=5 // pred_fallthru
        _
      %p203 = scmp.lt.s32.totalorder %s18, 2
      // Predicated region
      $region29: #{tpu_custom_call.1} parent=5 // pred_check
        %p204 = pneg %p203
      $region30: #{tpu_custom_call.1} parent=5 // pred_check_branch
        %206 = sbr.rel (%p204) target = $region32
      $region31: #{tpu_custom_call.1} parent=5 // pred_region
        // Predicated region
        $region33: #{tpu_custom_call.1} parent=31 // pred_check
          %p207 = pneg %p38
        $region34: #{tpu_custom_call.1} parent=31 // pred_check_branch
          %209 = sbr.rel (%p207) target = $region36
        $region35: #{tpu_custom_call.1} parent=31 // pred_region
          %s210 = sand.u32 %s28, 1
          %s211 = scalar_lea.sflag [#allocation3], %s210
          %s212 = sand.u32 %s28, 1
          %s213 = smul.addr %s212, 128
          %s214 = scalar_lea.vmem [#allocation2], %s213
          %s215 = smul.u32 16, %s18
          %217 = vsyncadd %s211, 0
          %s218 = smul.addr %s215, 8
          %s219 = scalar_lea.hbm %s0, %s218
          %s220 = sshll.u32 %s219, 4
          %s221 = int_to_ptr.hbm [resolvable:$true] %s220
          %s222 = sshll.u32 %s214, 4
          %s223 = int_to_ptr.vmem [resolvable:$true] %s222
          %228 = dma.hbm_to_vmem [thread:$0]  %s221, 2048, %s223, %s211, 128, 128, 8
        $region36: #{tpu_custom_call.1} parent=31 // pred_fallthru
          _
      $region32: #{tpu_custom_call.1} parent=5 // pred_fallthru
        _
      %p229 = scmp.le.s32.totalorder 1, %s18
      %p230 = scmp.lt.s32.totalorder %s18, 3
      %p231 = pnand %p229, %p230
      %p232 = pneg %p231
      // Predicated region
      $region37: #{tpu_custom_call.1} parent=5 // pred_check
        _
      $region38: #{tpu_custom_call.1} parent=5 // pred_check_branch
        %234 = sbr.rel (%p231) target = $region40
      $region39: #{tpu_custom_call.1} parent=5 // pred_region
        %s235 = ssub.s32 %s18, 1
        %s236 = sand.u32 %s31, 1
        %s237 = scalar_lea.sflag [#allocation3], %s236
        %s238 = sand.u32 %s31, 1
        %s239 = smul.addr %s238, 128
        %s240 = scalar_lea.vmem [#allocation2], %s239
        // Predicated region
        $region41: #{tpu_custom_call.1} parent=39 // pred_check
          %p241 = pneg %p44
        $region42: #{tpu_custom_call.1} parent=39 // pred_check_branch
          %243 = sbr.rel (%p241) target = $region44
        $region43: #{tpu_custom_call.1} parent=39 // pred_region
          %245 = dma.done %s237, 2048
        $region44: #{tpu_custom_call.1} parent=39 // pred_fallthru
          _
        // Predicated region
        $region45: #{tpu_custom_call.1} parent=39 // pred_check
          %p246 = pneg %p65
        $region46: #{tpu_custom_call.1} parent=39 // pred_check_branch
          %248 = sbr.rel (%p246) target = $region48
        $region47: #{tpu_custom_call.1} parent=39 // pred_region
          %250 = dma.done [#allocation6], 1024
        $region48: #{tpu_custom_call.1} parent=39 // pred_fallthru
          _
        // Predicated region
        $region49: #{tpu_custom_call.1} parent=39 // pred_check
          %p251 = pneg %p107
        $region50: #{tpu_custom_call.1} parent=39 // pred_check_branch
          %253 = sbr.rel (%p251) target = $region52
        $region51: #{tpu_custom_call.1} parent=39 // pred_region
          %255 = dma.done [#allocation6], 1024
        $region52: #{tpu_custom_call.1} parent=39 // pred_fallthru
          _
        %s256 = sand.u32 %s31, 1
        %s257 = scalar_lea.sflag [#allocation3], %s256
        %s258 = sand.u32 %s31, 1
        %s259 = smul.addr %s258, 128
        %s260 = scalar_lea.vmem [#allocation2], %s259
        %p261 = pneg %p44
        %p262 = pneg %p41
        %p263 = pneg %p65
        %p264 = pneg %p62
        %p265 = pneg %p86
        %p266 = pneg %p83
        %p267 = pneg %p107
        %p268 = pneg %p104
        %p269 = pneg %p128
        %p270 = pneg %p125
        %p271 = pneg %p154
        %p272 = pneg %p151
        %s273 = sand.u32 %s141, 1
        %s274 = scalar_lea.sflag [#allocation4], %s273
        %s275 = sand.u32 %s141, 1
        %s276 = smul.addr %s275, 128
        %s277 = scalar_lea.vmem [#allocation8], %s276
        %s278 = smul.u32 16, %s23
        %s279 = smul.u32 16, %s23
        %v280 = vld [vmem:[%s240] sm:$0xff]
        %v281 = vld [vmem:[%s240 + $0x8] sm:$0xff]
        %v282 = vld [vmem:[%s240 + $0x10] sm:$0xff]
        %v283 = vld [vmem:[%s240 + $0x18] sm:$0xff]
        %v284 = vld [vmem:[%s240 + $0x20] sm:$0xff]
        %v285 = vld [vmem:[%s240 + $0x28] sm:$0xff]
        %v286 = vld [vmem:[%s240 + $0x30] sm:$0xff]
        %v287 = vld [vmem:[%s240 + $0x38] sm:$0xff]
        %v288 = vld [vmem:[%s240 + $0x40] sm:$0xff]
        %v289 = vld [vmem:[%s240 + $0x48] sm:$0xff]
        %v290 = vld [vmem:[%s240 + $0x50] sm:$0xff]
        %v291 = vld [vmem:[%s240 + $0x58] sm:$0xff]
        %v292 = vld [vmem:[%s240 + $0x60] sm:$0xff]
        %v293 = vld [vmem:[%s240 + $0x68] sm:$0xff]
        %v294 = vld [vmem:[%s240 + $0x70] sm:$0xff]
        %v295 = vld [vmem:[%s240 + $0x78] sm:$0xff]
        %v296 = vpack.c.bf16 %v281, %v280
        %v297 = vpack.c.bf16 %v283, %v282
        %v298 = vpack.c.bf16 %v285, %v284
        %v299 = vpack.c.bf16 %v287, %v286
        %v300 = vpack.c.bf16 %v289, %v288
        %v301 = vpack.c.bf16 %v291, %v290
        %v302 = vpack.c.bf16 %v293, %v292
        %v303 = vpack.c.bf16 %v295, %v294
        %v304 = vld [vmem:[#allocation5] sm:$0xf]
        %v305 = vld [vmem:[#allocation5 + $0x4] sm:$0xf]
        %v306 = vld [vmem:[#allocation5 + $0x8] sm:$0xf]
        %v307 = vld [vmem:[#allocation5 + $0xc] sm:$0xf]
        %v308 = vld [vmem:[#allocation5 + $0x10] sm:$0xf]
        %v309 = vld [vmem:[#allocation5 + $0x14] sm:$0xf]
        %v310 = vld [vmem:[#allocation5 + $0x18] sm:$0xf]
        %v311 = vld [vmem:[#allocation5 + $0x1c] sm:$0xf]
        %v312 = vld [vmem:[#allocation5 + $0x20] sm:$0xf]
        %v313 = vld [vmem:[#allocation5 + $0x24] sm:$0xf]
        %v314 = vld [vmem:[#allocation5 + $0x28] sm:$0xf]
        %v315 = vld [vmem:[#allocation5 + $0x2c] sm:$0xf]
        %v316 = vld [vmem:[#allocation5 + $0x30] sm:$0xf]
        %v317 = vld [vmem:[#allocation5 + $0x34] sm:$0xf]
        %v318 = vld [vmem:[#allocation5 + $0x38] sm:$0xf]
        %v319 = vld [vmem:[#allocation5 + $0x3c] sm:$0xf]
        %v320 = vld [vmem:[%s2] sm:$0x1]
        %v322 = vperm.slane %v320, 0
        %v340 = vunpack.c.l.b16 %v304
        %v341 = vunpack.c.l.b16 %v305
        %v342 = vunpack.c.l.b16 %v306
        %v343 = vunpack.c.l.b16 %v307
        %v344 = vunpack.c.l.b16 %v308
        %v345 = vunpack.c.l.b16 %v309
        %v346 = vunpack.c.l.b16 %v310
        %v347 = vunpack.c.l.b16 %v311
        %v348 = vunpack.c.l.b16 %v312
        %v349 = vunpack.c.l.b16 %v313
        %v350 = vunpack.c.l.b16 %v314
        %v351 = vunpack.c.l.b16 %v315
        %v352 = vunpack.c.l.b16 %v316
        %v353 = vunpack.c.l.b16 %v317
        %v354 = vunpack.c.l.b16 %v318
        %v355 = vunpack.c.l.b16 %v319
        %v356 = vpack.c.b16 %v341, %v340
        %v357 = vpack.c.b16 %v343, %v342
        %v358 = vpack.c.b16 %v345, %v344
        %v359 = vpack.c.b16 %v347, %v346
        %v360 = vpack.c.b16 %v349, %v348
        %v361 = vpack.c.b16 %v351, %v350
        %v362 = vpack.c.b16 %v353, %v352
        %v363 = vpack.c.b16 %v355, %v354
        %372 = vmatpush.bf16.msra.mxu0 %v363
        %373 = vmatpush.bf16.msra.mxu0 %v362
        %374 = vmatpush.bf16.msra.mxu0 %v361
        %375 = vmatpush.bf16.msra.mxu0 %v360
        %376 = vmatpush.bf16.msra.mxu0 %v359
        %377 = vmatpush.bf16.msra.mxu0 %v358
        %378 = vmatpush.bf16.msra.mxu0 %v357
        %379 = vmatpush.bf16.msra.mxu0 %v356
        %380 = vmatmul.bf16.gmra.mxu0 %v296
        %v381 = vpop.f32.mrf.mxu0
        %v382 = vadd.f32 %v322, %v381
        %v383 = vpop.f32.mrf.mxu0
        %v384 = vadd.f32 %v322, %v383
        %385 = vmatmul.bf16.gmra.mxu0 %v297
        %v386 = vpop.f32.mrf.mxu0
        %v387 = vadd.f32 %v322, %v386
        %v388 = vpop.f32.mrf.mxu0
        %v389 = vadd.f32 %v322, %v388
        %390 = vmatmul.bf16.gmra.mxu0 %v298
        %v391 = vpop.f32.mrf.mxu0
        %v392 = vadd.f32 %v322, %v391
        %v393 = vpop.f32.mrf.mxu0
        %v394 = vadd.f32 %v322, %v393
        %395 = vmatmul.bf16.gmra.mxu0 %v299
        %v396 = vpop.f32.mrf.mxu0
        %v397 = vadd.f32 %v322, %v396
        %v398 = vpop.f32.mrf.mxu0
        %v399 = vadd.f32 %v322, %v398
        %400 = vmatmul.bf16.gmra.mxu0 %v300
        %v401 = vpop.f32.mrf.mxu0
        %v402 = vadd.f32 %v322, %v401
        %v403 = vpop.f32.mrf.mxu0
        %v404 = vadd.f32 %v322, %v403
        %405 = vmatmul.bf16.gmra.mxu0 %v301
        %v406 = vpop.f32.mrf.mxu0
        %v407 = vadd.f32 %v322, %v406
        %v408 = vpop.f32.mrf.mxu0
        %v409 = vadd.f32 %v322, %v408
        %410 = vmatmul.bf16.gmra.mxu0 %v302
        %v411 = vpop.f32.mrf.mxu0
        %v412 = vadd.f32 %v322, %v411
        %v413 = vpop.f32.mrf.mxu0
        %v414 = vadd.f32 %v322, %v413
        %415 = vmatmul.bf16.gmra.mxu0 %v303
        %v416 = vpop.f32.mrf.mxu0
        %v417 = vadd.f32 %v322, %v416
        %v418 = vpop.f32.mrf.mxu0
        %v419 = vadd.f32 %v322, %v418
        %420 = vdwg.mxu0
        %v421 = vmax.f32 %v382, 0.0
        %v422 = vmax.f32 %v384, 0.0
        %v423 = vmax.f32 %v387, 0.0
        %v424 = vmax.f32 %v389, 0.0
        %v425 = vmax.f32 %v392, 0.0
        %v426 = vmax.f32 %v394, 0.0
        %v427 = vmax.f32 %v397, 0.0
        %v428 = vmax.f32 %v399, 0.0
        %v429 = vmax.f32 %v402, 0.0
        %v430 = vmax.f32 %v404, 0.0
        %v431 = vmax.f32 %v407, 0.0
        %v432 = vmax.f32 %v409, 0.0
        %v433 = vmax.f32 %v412, 0.0
        %v434 = vmax.f32 %v414, 0.0
        %v435 = vmax.f32 %v417, 0.0
        %v436 = vmax.f32 %v419, 0.0
        %v437 = vpack.c.bf16 %v422, %v421
        %v438 = vpack.c.bf16 %v424, %v423
        %v439 = vpack.c.bf16 %v426, %v425
        %v440 = vpack.c.bf16 %v428, %v427
        %v441 = vpack.c.bf16 %v430, %v429
        %v442 = vpack.c.bf16 %v432, %v431
        %v443 = vpack.c.bf16 %v434, %v433
        %v444 = vpack.c.bf16 %v436, %v435
        %v445 = vld [vmem:[#allocation7] sm:$0xf]
        %v446 = vld [vmem:[#allocation7 + $0x4] sm:$0xf]
        %v447 = vld [vmem:[#allocation7 + $0x8] sm:$0xf]
        %v448 = vld [vmem:[#allocation7 + $0xc] sm:$0xf]
        %v449 = vld [vmem:[#allocation7 + $0x10] sm:$0xf]
        %v450 = vld [vmem:[#allocation7 + $0x14] sm:$0xf]
        %v451 = vld [vmem:[#allocation7 + $0x18] sm:$0xf]
        %v452 = vld [vmem:[#allocation7 + $0x1c] sm:$0xf]
        %v453 = vld [vmem:[#allocation7 + $0x20] sm:$0xf]
        %v454 = vld [vmem:[#allocation7 + $0x24] sm:$0xf]
        %v455 = vld [vmem:[#allocation7 + $0x28] sm:$0xf]
        %v456 = vld [vmem:[#allocation7 + $0x2c] sm:$0xf]
        %v457 = vld [vmem:[#allocation7 + $0x30] sm:$0xf]
        %v458 = vld [vmem:[#allocation7 + $0x34] sm:$0xf]
        %v459 = vld [vmem:[#allocation7 + $0x38] sm:$0xf]
        %v460 = vld [vmem:[#allocation7 + $0x3c] sm:$0xf]
        %v461 = vld [vmem:[%s4] sm:$0x1]
        %v463 = vperm.slane %v461, 0
        %v481 = vunpack.c.l.b16 %v445
        %v482 = vunpack.c.l.b16 %v446
        %v483 = vunpack.c.l.b16 %v447
        %v484 = vunpack.c.l.b16 %v448
        %v485 = vunpack.c.l.b16 %v449
        %v486 = vunpack.c.l.b16 %v450
        %v487 = vunpack.c.l.b16 %v451
        %v488 = vunpack.c.l.b16 %v452
        %v489 = vunpack.c.l.b16 %v453
        %v490 = vunpack.c.l.b16 %v454
        %v491 = vunpack.c.l.b16 %v455
        %v492 = vunpack.c.l.b16 %v456
        %v493 = vunpack.c.l.b16 %v457
        %v494 = vunpack.c.l.b16 %v458
        %v495 = vunpack.c.l.b16 %v459
        %v496 = vunpack.c.l.b16 %v460
        %v497 = vpack.c.b16 %v482, %v481
        %v498 = vpack.c.b16 %v484, %v483
        %v499 = vpack.c.b16 %v486, %v485
        %v500 = vpack.c.b16 %v488, %v487
        %v501 = vpack.c.b16 %v490, %v489
        %v502 = vpack.c.b16 %v492, %v491
        %v503 = vpack.c.b16 %v494, %v493
        %v504 = vpack.c.b16 %v496, %v495
        %513 = vmatpush.bf16.msra.mxu0 %v504
        %514 = vmatpush.bf16.msra.mxu0 %v503
        %515 = vmatpush.bf16.msra.mxu0 %v502
        %516 = vmatpush.bf16.msra.mxu0 %v501
        %517 = vmatpush.bf16.msra.mxu0 %v500
        %518 = vmatpush.bf16.msra.mxu0 %v499
        %519 = vmatpush.bf16.msra.mxu0 %v498
        %520 = vmatpush.bf16.msra.mxu0 %v497
        %521 = vmatmul.bf16.gmra.mxu0 %v437
        %v522 = vpop.f32.mrf.mxu0
        %v523 = vadd.f32 %v463, %v522
        %v524 = vpop.f32.mrf.mxu0
        %v525 = vadd.f32 %v463, %v524
        %526 = vmatmul.bf16.gmra.mxu0 %v438
        %v527 = vpop.f32.mrf.mxu0
        %v528 = vadd.f32 %v463, %v527
        %v529 = vpop.f32.mrf.mxu0
        %v530 = vadd.f32 %v463, %v529
        %531 = vmatmul.bf16.gmra.mxu0 %v439
        %v532 = vpop.f32.mrf.mxu0
        %v533 = vadd.f32 %v463, %v532
        %v534 = vpop.f32.mrf.mxu0
        %v535 = vadd.f32 %v463, %v534
        %536 = vmatmul.bf16.gmra.mxu0 %v440
        %v537 = vpop.f32.mrf.mxu0
        %v538 = vadd.f32 %v463, %v537
        %v539 = vpop.f32.mrf.mxu0
        %v540 = vadd.f32 %v463, %v539
        %541 = vmatmul.bf16.gmra.mxu0 %v441
        %v542 = vpop.f32.mrf.mxu0
        %v543 = vadd.f32 %v463, %v542
        %v544 = vpop.f32.mrf.mxu0
        %v545 = vadd.f32 %v463, %v544
        %546 = vmatmul.bf16.gmra.mxu0 %v442
        %v547 = vpop.f32.mrf.mxu0
        %v548 = vadd.f32 %v463, %v547
        %v549 = vpop.f32.mrf.mxu0
        %v550 = vadd.f32 %v463, %v549
        %551 = vmatmul.bf16.gmra.mxu0 %v443
        %v552 = vpop.f32.mrf.mxu0
        %v553 = vadd.f32 %v463, %v552
        %v554 = vpop.f32.mrf.mxu0
        %v555 = vadd.f32 %v463, %v554
        %556 = vmatmul.bf16.gmra.mxu0 %v444
        %v557 = vpop.f32.mrf.mxu0
        %v558 = vadd.f32 %v463, %v557
        %v559 = vpop.f32.mrf.mxu0
        %v560 = vadd.f32 %v463, %v559
        %561 = vdwg.mxu0
        %562 = vst [vmem:[%s277] sm:$0xff] %v523
        %563 = vst [vmem:[%s277 + $0x8] sm:$0xff] %v525
        %564 = vst [vmem:[%s277 + $0x10] sm:$0xff] %v528
        %565 = vst [vmem:[%s277 + $0x18] sm:$0xff] %v530
        %566 = vst [vmem:[%s277 + $0x20] sm:$0xff] %v533
        %567 = vst [vmem:[%s277 + $0x28] sm:$0xff] %v535
        %568 = vst [vmem:[%s277 + $0x30] sm:$0xff] %v538
        %569 = vst [vmem:[%s277 + $0x38] sm:$0xff] %v540
        %570 = vst [vmem:[%s277 + $0x40] sm:$0xff] %v543
        %571 = vst [vmem:[%s277 + $0x48] sm:$0xff] %v545
        %572 = vst [vmem:[%s277 + $0x50] sm:$0xff] %v548
        %573 = vst [vmem:[%s277 + $0x58] sm:$0xff] %v550
        %574 = vst [vmem:[%s277 + $0x60] sm:$0xff] %v553
        %575 = vst [vmem:[%s277 + $0x68] sm:$0xff] %v555
        %576 = vst [vmem:[%s277 + $0x70] sm:$0xff] %v558
        %577 = vst [vmem:[%s277 + $0x78] sm:$0xff] %v560
        %s578 = sand.u32 %s141, 1
        %s579 = scalar_lea.sflag [#allocation4], %s578
        %s580 = sand.u32 %s141, 1
        %s581 = smul.addr %s580, 128
        %s582 = scalar_lea.vmem [#allocation8], %s581
        // Predicated region
        $region53: #{tpu_custom_call.1} parent=39 // pred_check
          %p583 = pneg %p151
        $region54: #{tpu_custom_call.1} parent=39 // pred_check_branch
          %585 = sbr.rel (%p583) target = $region56
        $region55: #{tpu_custom_call.1} parent=39 // pred_region
          %s586 = smul.u32 16, %s23
          %588 = vsyncadd %s579, 0
          %s589 = smul.addr %s586, 8
          %s590 = scalar_lea.hbm %s5, %s589
          %s591 = sshll.u32 %s582, 4
          %s592 = int_to_ptr.vmem [resolvable:$true] %s591
          %s593 = sshll.u32 %s590, 4
          %s594 = int_to_ptr.hbm [resolvable:$true] %s593
          %599 = dma.vmem_to_hbm [thread:$0]  %s592, 2048, %s594, %s579, 128, 128, 8
        $region56: #{tpu_custom_call.1} parent=39 // pred_fallthru
          _
      $region40: #{tpu_custom_call.1} parent=5 // pred_fallthru
        _
      %p600 = scmp.le.s32.totalorder 2, %s18
      // Predicated region
      $region57: #{tpu_custom_call.1} parent=5 // pred_check
        %p601 = pneg %p600
      $region58: #{tpu_custom_call.1} parent=5 // pred_check_branch
        %603 = sbr.rel (%p601) target = $region60
      $region59: #{tpu_custom_call.1} parent=5 // pred_region
        %s604 = ssub.s32 %s18, 2
        // Predicated region
        $region61: #{tpu_custom_call.1} parent=59 // pred_check
          %p605 = pneg %p157
        $region62: #{tpu_custom_call.1} parent=59 // pred_check_branch
          %607 = sbr.rel (%p605) target = $region64
        $region63: #{tpu_custom_call.1} parent=59 // pred_region
          %s608 = sand.u32 %s142, 1
          %s609 = scalar_lea.sflag [#allocation4], %s608
          %s610 = sand.u32 %s142, 1
          %s611 = smul.addr %s610, 128
          %s612 = scalar_lea.vmem [#allocation8], %s611
          %614 = dma.done %s609, 2048
        $region64: #{tpu_custom_call.1} parent=59 // pred_fallthru
          _
      $region60: #{tpu_custom_call.1} parent=5 // pred_fallthru
        _
    $region6: #{tpu_custom_call.1} parent=1 // loop_footer
      %s22 = sadd.s32 1, %s18
    $region7: #{tpu_custom_call.1} parent=1 // loop_footer_branch
      %17 = sbr.rel target = $region3
    $region8: #{tpu_custom_call.1} parent=1 // loop_exit
      _
    %615 = vsyncpa [#allocation3], 1
    %s616 = scalar_lea.sflag [#allocation3], 1
    %617 = vsyncpa %s616, 1
    %618 = vsyncpa [#allocation6], 1
    %619 = vsyncpa [#allocation4], 1
    %s620 = scalar_lea.sflag [#allocation4], 1
    %621 = vsyncpa %s620, 1

</llo_original>
